<compile_context>
chip_gen: v5e
topology: v5e:2x2
jax: 0.10.0
libtpu: 0.0.40
codegen_flags: <defaults>
</compile_context>

<pallas_src>
import functools

import jax
import jax.numpy as jnp
from jax.experimental import pallas as pl
from jax.experimental.pallas import tpu as pltpu

LANES = 128
SUBLANES = 8


def _pick_tiling():
    """Return (max_tile_rows, vmem_limit_bytes), gated on physical VMEM."""
    max_rows, limit = 4096, 40 * 1024 * 1024       # safe on v5e / v6e / v7x
    try:
        vmem = pltpu.get_tpu_info().vmem_capacity_bytes
        if vmem >= 100 * 1024 * 1024:              # v5e / v6e: 128 MiB VMEM
            max_rows, limit = 8192, 64 * 1024 * 1024
    except Exception:
        pass
    return max_rows, limit


def _dice_partial_kernel(x_ref, t_ref, out_ref, *, tile_rows):
    """Accumulate [sum(sig(x)*t), sum(sig(x)), sum(t)] folded to (8,128) vregs."""
    i = pl.program_id(1)

    @pl.when(i == 0)
    def _():
        out_ref[...] = jnp.zeros_like(out_ref)

    x = jax.nn.sigmoid(x_ref[...].astype(jnp.float32))
    t = t_ref[...].astype(jnp.float32)

    def _fold(v):  # (tile_rows, 128) -> (8, 128): pure VPU vreg adds, no XLU
        return jnp.sum(v.reshape(tile_rows // SUBLANES, SUBLANES, LANES), axis=0)

    out_ref[0] += _fold(x * t)   # intersection
    out_ref[1] += _fold(x)       # sum(sigmoid(x))
    out_ref[2] += _fold(t)       # sum(targets)


def _dice_sums_jnp(x, t):
    xf = jax.nn.sigmoid(x.astype(jnp.float32))
    tf = t.astype(jnp.float32)
    return jnp.sum(xf * tf), jnp.sum(xf), jnp.sum(tf)


def dice_loss(inputs, targets, smooth=0.01):
    """Pallas TPU implementation of DiceLoss.forward (returns a scalar f32)."""
    x = jnp.ravel(inputs)
    t = jnp.ravel(targets)
    n = x.shape[0]

    max_tile_rows, vmem_limit = _pick_tiling()

    # Pick the biggest lane-dense tile that fits; keep it a multiple of 32
    # rows whenever possible so bf16/int8 packed sublane tilings are legal.
    rows_total = n // LANES
    if rows_total >= 32:
        tile_rows = min(max_tile_rows, (rows_total // 32) * 32)
    elif rows_total >= SUBLANES:
        tile_rows = (rows_total // SUBLANES) * SUBLANES
    else:
        tile_rows = 0

    inter = jnp.float32(0.0)
    s_x = jnp.float32(0.0)
    s_t = jnp.float32(0.0)
    body_elems = 0

    if tile_rows > 0:
        block_elems = tile_rows * LANES
        body_tiles = n // block_elems              # >= 1 by construction
        body_elems = body_tiles * block_elems
        body_rows = body_tiles * tile_rows
        num_outer = 2 if (body_tiles >= 2 and body_tiles % 2 == 0) else 1
        inner_tiles = body_tiles // num_outer

        def _maybe_upcast(a):
            # Stream narrow dtypes natively when the packed sublane tiling
            # divides the row tile (always true for >=32 rows).
            dt = a.dtype
            if dt == jnp.float32:
                return a
            if dt in (jnp.bfloat16, jnp.float16, jnp.int8, jnp.uint8):
                sublane_mult = SUBLANES * (4 // dt.itemsize)
                if tile_rows % sublane_mult == 0:
                    return a
            # Only reached for tiny inputs or exotic dtypes where the extra
            # HBM pass is irrelevant.
            return a.astype(jnp.float32)

        x2 = _maybe_upcast(x[:body_elems]).reshape(body_rows, LANES)
        t2 = _maybe_upcast(t[:body_elems]).reshape(body_rows, LANES)

        def tile_map(c, i):
            return (c * inner_tiles + i, 0)

        in_bytes = (x2.size * x2.dtype.itemsize) + (t2.size * t2.dtype.itemsize)
        out_bytes = num_outer * 3 * SUBLANES * LANES * 4

        partials = pl.pallas_call(
            functools.partial(_dice_partial_kernel, tile_rows=tile_rows),
            out_shape=jax.ShapeDtypeStruct(
                (num_outer, 3, SUBLANES, LANES), jnp.float32),
            grid_spec=pltpu.PrefetchScalarGridSpec(
                num_scalar_prefetch=0,
                grid=(num_outer, inner_tiles),
                in_specs=[
                    pl.BlockSpec((tile_rows, LANES), tile_map),
                    pl.BlockSpec((tile_rows, LANES), tile_map),
                ],
                out_specs=pl.BlockSpec((None, 3, SUBLANES, LANES),
                                       lambda c, i: (c, 0, 0, 0)),
            ),
            compiler_params=pltpu.CompilerParams(
                dimension_semantics=("parallel", "arbitrary"),
                vmem_limit_bytes=vmem_limit,
            ),
            cost_estimate=pl.CostEstimate(
                flops=8 * body_elems,
                transcendentals=body_elems,
                bytes_accessed=in_bytes + out_bytes,
            ),
        )(x2, t2)

        sums = jnp.sum(partials, axis=(0, 2, 3))   # (3,) tiny final reduce
        inter, s_x, s_t = sums[0], sums[1], sums[2]

    if body_elems < n:
        # Ragged tail (< one block): plain jnp, no pad, no per-step mask.
        ti, tx, tt = _dice_sums_jnp(x[body_elems:], t[body_elems:])
        inter = inter + ti
        s_x = s_x + tx
        s_t = s_t + tt

    dice = (2.0 * inter + smooth) / (s_x + s_t + smooth)
    return 1.0 - dice


def _dice_loss_ref(inputs, targets, smooth=0.01):
    x = jax.nn.sigmoid(jnp.ravel(inputs).astype(jnp.float32))
    t = jnp.ravel(targets).astype(jnp.float32)
    inter = jnp.sum(x * t)
    dice = (2.0 * inter + smooth) / (jnp.sum(x) + jnp.sum(t) + smooth)
    return 1.0 - dice


if __name__ == "__main__":
    key = jax.random.PRNGKey(0)
    k1, k2, k3, k4 = jax.random.split(key, 4)

    # NCHW logits and binary targets, consistent with a segmentation head.
    inputs = jax.random.normal(k1, (2, 4, 16, 16), dtype=jnp.float32)
    targets = (jax.random.uniform(k2, (2, 4, 16, 16)) > 0.5).astype(jnp.float32)
    loss = dice_loss(inputs, targets)
    jax.block_until_ready(loss)
    ref = _dice_loss_ref(inputs, targets)
    assert jnp.allclose(loss, ref, atol=1e-5, rtol=1e-5), (loss, ref)

    # Ragged element count: exercises kernel body + jnp tail path.
    inputs2 = jax.random.normal(k3, (2, 5, 13, 17), dtype=jnp.float32)
    targets2 = (jax.random.uniform(k4, (2, 5, 13, 17)) > 0.5).astype(jnp.float32)
    loss2 = dice_loss(inputs2, targets2)
    jax.block_until_ready(loss2)
    ref2 = _dice_loss_ref(inputs2, targets2)
    assert jnp.allclose(loss2, ref2, atol=1e-5, rtol=1e-5), (loss2, ref2)

    print("KERNEL_OK")
</pallas_src>

<mosaic_0001>
module attributes {stable_mosaic.version = 11 : i64} {
  func.func @_dice_partial_kernel(%arg0: i32, %arg1: i32, %arg2: memref<16x128xf32, #tpu.memory_space<vmem>>, %arg3: memref<16x128xf32, #tpu.memory_space<vmem>>, %arg4: memref<1x3x8x128xf32, #tpu.memory_space<vmem>>) attributes {dimension_semantics = [#tpu.dimension_semantics<parallel>, #tpu.dimension_semantics<arbitrary>], iteration_bounds = array<i64: 1, 1>, scalar_prefetch = 0 : i64, scratch_operands = 0 : i64, tpu.core_type = #tpu.core_type<tc>, window_params = [{transform_indices = @transform_0, window_bounds = array<i64: 16, 128>}, {transform_indices = @transform_1, window_bounds = array<i64: 16, 128>}, {transform_indices = @transform_2, window_bounds = array<i64: 1, 3, 8, 128>}]} {
    %c0_i32 = arith.constant 0 : i32
    %0 = arith.cmpi eq, %arg1, %c0_i32 : i32
    %1 = arith.extui %0 : i1 to i32
    %c0_i32_0 = arith.constant 0 : i32
    %2 = arith.cmpi ne, %1, %c0_i32_0 : i32
    scf.if %2 {
      %cst_29 = arith.constant 0.000000e+00 : f32
      %35 = vector.broadcast %cst_29 : f32 to vector<3x8x128xf32>
      %c0_30 = arith.constant 0 : index
      %c0_31 = arith.constant 0 : index
      %c0_32 = arith.constant 0 : index
      %c0_33 = arith.constant 0 : index
      %36 = vector.load %arg4[%c0_30, %c0_31, %c0_32, %c0_33] : memref<1x3x8x128xf32, #tpu.memory_space<vmem>>, vector<1x3x8x128xf32>
      %37 = vector.shape_cast %36 : vector<1x3x8x128xf32> to vector<3x8x128xf32>
      %38 = vector.shape_cast %35 : vector<3x8x128xf32> to vector<1x3x8x128xf32>
      tpu.vector_store %arg4[%c0_30, %c0_31, %c0_32, %c0_33], %38 {strides = array<i32>} : memref<1x3x8x128xf32, #tpu.memory_space<vmem>>, vector<1x3x8x128xf32>,
    } else {
    }
    %c0 = arith.constant 0 : index
    %c0_1 = arith.constant 0 : index
    %3 = vector.load %arg2[%c0, %c0_1] : memref<16x128xf32, #tpu.memory_space<vmem>>, vector<16x128xf32>
    %4 = arith.negf %3 : vector<16x128xf32>
    %5 = math.exp %4 : vector<16x128xf32>
    %cst = arith.constant 1.000000e+00 : f32
    %6 = vector.broadcast %cst : f32 to vector<16x128xf32>
    %7 = arith.addf %6, %5 : vector<16x128xf32>
    %8 = arith.divf %6, %7 : vector<16x128xf32>
    %c0_2 = arith.constant 0 : index
    %c0_3 = arith.constant 0 : index
    %9 = vector.load %arg3[%c0_2, %c0_3] : memref<16x128xf32, #tpu.memory_space<vmem>>, vector<16x128xf32>
    %c0_4 = arith.constant 0 : index
    %c0_5 = arith.constant 0 : index
    %c0_6 = arith.constant 0 : index
    %c0_7 = arith.constant 0 : index
    %10 = vector.load %arg4[%c0_4, %c0_5, %c0_6, %c0_7] : memref<1x3x8x128xf32, #tpu.memory_space<vmem>>, vector<1x1x8x128xf32>
    %11 = vector.shape_cast %10 : vector<1x1x8x128xf32> to vector<8x128xf32>
    %12 = arith.mulf %8, %9 : vector<16x128xf32>
    %13 = vector.shape_cast %12 : vector<16x128xf32> to vector<2x8x128xf32>
    %cst_8 = arith.constant dense<0.000000e+00> : vector<8x128xf32>
    %14 = vector.multi_reduction <add>, %13, %cst_8 [0] : vector<2x8x128xf32> to vector<8x128xf32>
    %15 = arith.addf %11, %14 : vector<8x128xf32>
    %c0_9 = arith.constant 0 : index
    %c0_10 = arith.constant 0 : index
    %c0_11 = arith.constant 0 : index
    %c0_12 = arith.constant 0 : index
    %16 = vector.load %arg4[%c0_9, %c0_10, %c0_11, %c0_12] : memref<1x3x8x128xf32, #tpu.memory_space<vmem>>, vector<1x1x8x128xf32>
    %17 = vector.shape_cast %16 : vector<1x1x8x128xf32> to vector<8x128xf32>
    %18 = vector.shape_cast %15 : vector<8x128xf32> to vector<1x1x8x128xf32>
    tpu.vector_store %arg4[%c0_9, %c0_10, %c0_11, %c0_12], %18 {strides = array<i32>} : memref<1x3x8x128xf32, #tpu.memory_space<vmem>>, vector<1x1x8x128xf32>,
    %c0_13 = arith.constant 0 : index
    %c1 = arith.constant 1 : index
    %c0_14 = arith.constant 0 : index
    %c0_15 = arith.constant 0 : index
    %19 = vector.load %arg4[%c0_13, %c1, %c0_14, %c0_15] : memref<1x3x8x128xf32, #tpu.memory_space<vmem>>, vector<1x1x8x128xf32>
    %20 = vector.shape_cast %19 : vector<1x1x8x128xf32> to vector<8x128xf32>
    %21 = vector.shape_cast %8 : vector<16x128xf32> to vector<2x8x128xf32>
    %cst_16 = arith.constant dense<0.000000e+00> : vector<8x128xf32>
    %22 = vector.multi_reduction <add>, %21, %cst_16 [0] : vector<2x8x128xf32> to vector<8x128xf32>
    %23 = arith.addf %20, %22 : vector<8x128xf32>
    %c0_17 = arith.constant 0 : index
    %c1_18 = arith.constant 1 : index
    %c0_19 = arith.constant 0 : index
    %c0_20 = arith.constant 0 : index
    %24 = vector.load %arg4[%c0_17, %c1_18, %c0_19, %c0_20] : memref<1x3x8x128xf32, #tpu.memory_space<vmem>>, vector<1x1x8x128xf32>
    %25 = vector.shape_cast %24 : vector<1x1x8x128xf32> to vector<8x128xf32>
    %26 = vector.shape_cast %23 : vector<8x128xf32> to vector<1x1x8x128xf32>
    tpu.vector_store %arg4[%c0_17, %c1_18, %c0_19, %c0_20], %26 {strides = array<i32>} : memref<1x3x8x128xf32, #tpu.memory_space<vmem>>, vector<1x1x8x128xf32>,
    %c0_21 = arith.constant 0 : index
    %c2 = arith.constant 2 : index
    %c0_22 = arith.constant 0 : index
    %c0_23 = arith.constant 0 : index
    %27 = vector.load %arg4[%c0_21, %c2, %c0_22, %c0_23] : memref<1x3x8x128xf32, #tpu.memory_space<vmem>>, vector<1x1x8x128xf32>
    %28 = vector.shape_cast %27 : vector<1x1x8x128xf32> to vector<8x128xf32>
    %29 = vector.shape_cast %9 : vector<16x128xf32> to vector<2x8x128xf32>
    %cst_24 = arith.constant dense<0.000000e+00> : vector<8x128xf32>
    %30 = vector.multi_reduction <add>, %29, %cst_24 [0] : vector<2x8x128xf32> to vector<8x128xf32>
    %31 = arith.addf %28, %30 : vector<8x128xf32>
    %c0_25 = arith.constant 0 : index
    %c2_26 = arith.constant 2 : index
    %c0_27 = arith.constant 0 : index
    %c0_28 = arith.constant 0 : index
    %32 = vector.load %arg4[%c0_25, %c2_26, %c0_27, %c0_28] : memref<1x3x8x128xf32, #tpu.memory_space<vmem>>, vector<1x1x8x128xf32>
    %33 = vector.shape_cast %32 : vector<1x1x8x128xf32> to vector<8x128xf32>
    %34 = vector.shape_cast %31 : vector<8x128xf32> to vector<1x1x8x128xf32>
    tpu.vector_store %arg4[%c0_25, %c2_26, %c0_27, %c0_28], %34 {strides = array<i32>} : memref<1x3x8x128xf32, #tpu.memory_space<vmem>>, vector<1x1x8x128xf32>,
    return
  }
  func.func @transform_0(%arg0: i32, %arg1: i32) -> (i32, i32) {
    %c1_i32 = arith.constant 1 : i32
    %0 = arith.muli %arg0, %c1_i32 : i32
    %1 = arith.addi %0, %arg1 : i32
    %c0_i32 = arith.constant 0 : i32
    %c0_i32_0 = arith.constant 0 : i32
    return %1, %c0_i32 : i32, i32
  }
  func.func @transform_1(%arg0: i32, %arg1: i32) -> (i32, i32) {
    %c1_i32 = arith.constant 1 : i32
    %0 = arith.muli %arg0, %c1_i32 : i32
    %1 = arith.addi %0, %arg1 : i32
    %c0_i32 = arith.constant 0 : i32
    %c0_i32_0 = arith.constant 0 : i32
    return %1, %c0_i32 : i32, i32
  }
  func.func @transform_2(%arg0: i32, %arg1: i32) -> (i32, i32, i32, i32) {
    %c0_i32 = arith.constant 0 : i32
    %c0_i32_0 = arith.constant 0 : i32
    %c0_i32_1 = arith.constant 0 : i32
    %c0_i32_2 = arith.constant 0 : i32
    return %arg0, %c0_i32, %c0_i32_0, %c0_i32_1 : i32, i32, i32, i32
  }
}

</mosaic_0001>

<llo_original>
// kernel: tpu_custom_call.1
$region0: #{tpu_custom_call.1}
  #allocation0 [shape = 'u32[]', space=smem, size = 0x4, offset = 0x4, fixed_abs, tag = 'smem constant byte address 0x4 - core index']
  #allocation1 [shape = 'u32[72,128]{1,0:T(1,128)}', space=vmem, size = 0x9000, scoped, tag = 'internal scratch']
  %s0 = inlined_call_operand.hbm [shape: f32[16,128], index: 0, kind: input, shape index: {}]
  %s1 = inlined_call_operand.hbm [shape: f32[16,128], index: 1, kind: input, shape index: {}]
  %s2 = inlined_call_operand.hbm [shape: f32[1,3,8,128], index: 2, kind: output, shape index: {}]
  %s3 = sld [smem:[#allocation0]]
  $region30: #{tpu_custom_call.1} parent=0
    _
  %s5 = ssub.s32 1, %s3
  %s6 = scalar_select 0, %s5, %s3
  $region1: #{tpu_custom_call.1} parent=0
    #allocation2 [shape = 'u8[8192]{0}', space=vmem, size = 0x2000, scoped, tag = 'input window, operand 0, single buffered']
    #allocation3 [shape = 's32[1]{0}', space=sflag, size = 0x4, scoped, tag = 'scoped memory for tpu_custom_call.1']
    #allocation4 [shape = 's32[1]{0}', space=sflag, size = 0x4, scoped, tag = 'scoped memory for tpu_custom_call.1']
    #allocation5 [shape = 'u8[8192]{0}', space=vmem, size = 0x2000, scoped, tag = 'input window, operand 1, single buffered']
    #allocation6 [shape = 's32[1]{0}', space=sflag, size = 0x4, scoped, tag = 'scoped memory for tpu_custom_call.1']
    #allocation7 [shape = 'u8[12288]{0}', space=vmem, size = 0x3000, scoped, tag = 'output window, operand 0, single buffered']
    %7 = vsyncpa [#allocation3], 0
    %8 = vsyncpa [#allocation6], 0
    %9 = vsyncpa [#allocation4], 0
    // Predicated region
    $region2: #{tpu_custom_call.1} parent=1 // pred_check
      _
    $region3: #{tpu_custom_call.1} parent=1 // pred_check_branch
      %11 = sbr.rel (0) target = $region5
    $region4: #{tpu_custom_call.1} parent=1 // pred_region
      %s12 = sadd.s32 0, 0
      %s13 = smul.u32 2, %s12
      %15 = vsyncadd [#allocation3], 0
      %s16 = smul.addr %s13, 8
      %s17 = scalar_lea.hbm %s0, %s16
      %s18 = sshll.u32 %s17, 4
      %s19 = int_to_ptr.hbm [resolvable:$true] %s18
      %s20 = sshll.u32 [#allocation2], 4
      %s21 = int_to_ptr.vmem [resolvable:$true] %s20
      %26 = dma.hbm_to_vmem [thread:$0]  %s19, 256, %s21, [#allocation3], 128, 128, 8
    $region5: #{tpu_custom_call.1} parent=1 // pred_fallthru
      _
    // Predicated region
    $region6: #{tpu_custom_call.1} parent=1 // pred_check
      _
    $region7: #{tpu_custom_call.1} parent=1 // pred_check_branch
      %28 = sbr.rel (0) target = $region9
    $region8: #{tpu_custom_call.1} parent=1 // pred_region
      %s29 = sadd.s32 0, 0
      %s30 = smul.u32 2, %s29
      %32 = vsyncadd [#allocation6], 0
      %s33 = smul.addr %s30, 8
      %s34 = scalar_lea.hbm %s1, %s33
      %s35 = sshll.u32 %s34, 4
      %s36 = int_to_ptr.hbm [resolvable:$true] %s35
      %s37 = sshll.u32 [#allocation5], 4
      %s38 = int_to_ptr.vmem [resolvable:$true] %s37
      %43 = dma.hbm_to_vmem [thread:$0]  %s36, 256, %s38, [#allocation6], 128, 128, 8
    $region9: #{tpu_custom_call.1} parent=1 // pred_fallthru
      _
    // Predicated region
    $region10: #{tpu_custom_call.1} parent=1 // pred_check
      _
    $region11: #{tpu_custom_call.1} parent=1 // pred_check_branch
      %45 = sbr.rel (0) target = $region13
    $region12: #{tpu_custom_call.1} parent=1 // pred_region
      %47 = dma.done [#allocation3], 256
    $region13: #{tpu_custom_call.1} parent=1 // pred_fallthru
      _
    // Predicated region
    $region14: #{tpu_custom_call.1} parent=1 // pred_check
      _
    $region15: #{tpu_custom_call.1} parent=1 // pred_check_branch
      %49 = sbr.rel (0) target = $region17
    $region16: #{tpu_custom_call.1} parent=1 // pred_region
      %51 = dma.done [#allocation6], 256
    $region17: #{tpu_custom_call.1} parent=1 // pred_fallthru
      _
    %s52 = sadd.s32 0, 0
    %s53 = smul.u32 2, %s52
    %s54 = sadd.s32 0, 0
    %s55 = smul.u32 2, %s54
    %p56 = scmp.eq.s32.totalorder 0, 0
    // Predicated region
    $region18: #{tpu_custom_call.1} parent=1 // pred_check
      %p57 = pneg %p56
    $region19: #{tpu_custom_call.1} parent=1 // pred_check_branch
      %59 = sbr.rel (%p57) target = $region21
    $region20: #{tpu_custom_call.1} parent=1 // pred_region
      %60 = vst [vmem:[#allocation7] sm:$0xff] 0.0
      %61 = vst [vmem:[#allocation7 + $0x8] sm:$0xff] 0.0
      %62 = vst [vmem:[#allocation7 + $0x10] sm:$0xff] 0.0
    $region21: #{tpu_custom_call.1} parent=1 // pred_fallthru
      _
    %v63 = vld [vmem:[#allocation2] sm:$0xff]
    %v64 = vld [vmem:[#allocation2 + $0x8] sm:$0xff]
    %v65 = vxor.u32 %v63, 2147483648
    %v66 = vxor.u32 %v64, 2147483648
    %v67 = vmul.f32 %v65, 1.442695
    %v68 = vpow.pop %v67
    %v69 = vmul.f32 %v66, 1.442695
    %v70 = vpow.pop %v69
    %v71 = vadd.f32 %v68, 1.0
    %v72 = vadd.f32 %v70, 1.0
    %v73 = vrcp.pop %v71
    %v74 = vmul.f32 %v71, %v73
    %v75 = vsub.f32 1.0, %v74
    %v76 = vmul.f32 %v73, %v75
    %v77 = vadd.f32 %v73, %v76
    %vm78 = vweird.f32 %v71
    %vm79 = vweird.f32 %v73
    %vm80 = vmor %vm78, %vm79
    %v81 = vsel %vm80, %v73, %v77
    %v82 = vand.u32 2147483647, %v71
    %vm83 = vcmp.eq.f32.partialorder %v82, 8.507059e+37
    %v84 = vand.u32 %v71, 2147483648
    %v85 = vor.u32 1.1754944e-38, %v84
    %v86 = vsel %vm83, %v85, %v81
    %v87 = vmul.f32 1.0, %v86
    %v88 = vrcp.pop %v72
    %v89 = vmul.f32 %v72, %v88
    %v90 = vsub.f32 1.0, %v89
    %v91 = vmul.f32 %v88, %v90
    %v92 = vadd.f32 %v88, %v91
    %vm93 = vweird.f32 %v72
    %vm94 = vweird.f32 %v88
    %vm95 = vmor %vm93, %vm94
    %v96 = vsel %vm95, %v88, %v92
    %v97 = vand.u32 2147483647, %v72
    %vm98 = vcmp.eq.f32.partialorder %v97, 8.507059e+37
    %v99 = vand.u32 %v72, 2147483648
    %v100 = vor.u32 1.1754944e-38, %v99
    %v101 = vsel %vm98, %v100, %v96
    %v102 = vmul.f32 1.0, %v101
    %v103 = vld [vmem:[#allocation5] sm:$0xff]
    %v104 = vld [vmem:[#allocation5 + $0x8] sm:$0xff]
    %v105 = vld [vmem:[#allocation7] sm:$0xff]
    %v106 = vmul.f32 %v87, %v103
    %v107 = vmul.f32 %v102, %v104
    %v108 = vadd.f32 %v106, %v107
    %v109 = vadd.f32 %v105, %v108
    %110 = vst [vmem:[#allocation7] sm:$0xff] %v109
    %s111 = scalar_lea.vmem [#allocation7], 8
    %v112 = vld [vmem:[%s111] sm:$0xff]
    %v113 = vadd.f32 %v87, %v102
    %v114 = vadd.f32 %v112, %v113
    %115 = vst [vmem:[%s111] sm:$0xff] %v114
    %s116 = scalar_lea.vmem [#allocation7], 16
    %v117 = vld [vmem:[%s116] sm:$0xff]
    %v118 = vadd.f32 %v103, %v104
    %v119 = vadd.f32 %v117, %v118
    %120 = vst [vmem:[%s116] sm:$0xff] %v119
    // Predicated region
    $region22: #{tpu_custom_call.1} parent=1 // pred_check
      _
    $region23: #{tpu_custom_call.1} parent=1 // pred_check_branch
      %122 = sbr.rel (0) target = $region25
    $region24: #{tpu_custom_call.1} parent=1 // pred_region
      %124 = vsyncadd [#allocation4], 0
      %s125 = sshll.u32 [#allocation7], 4
      %s126 = int_to_ptr.vmem [resolvable:$true] %s125
      %s127 = sshll.u32 %s2, 4
      %s128 = int_to_ptr.hbm [resolvable:$true] %s127
      %133 = dma.vmem_to_hbm [thread:$0]  %s126, 384, %s128, [#allocation4], 128, 128, 8
    $region25: #{tpu_custom_call.1} parent=1 // pred_fallthru
      _
    // Predicated region
    $region26: #{tpu_custom_call.1} parent=1 // pred_check
      _
    $region27: #{tpu_custom_call.1} parent=1 // pred_check_branch
      %135 = sbr.rel (0) target = $region29
    $region28: #{tpu_custom_call.1} parent=1 // pred_region
      %137 = dma.done [#allocation4], 384
    $region29: #{tpu_custom_call.1} parent=1 // pred_fallthru
      _
    %138 = vsyncpa [#allocation3], 1
    %139 = vsyncpa [#allocation6], 1
    %140 = vsyncpa [#allocation4], 1

</llo_original>
